<compile_context>
chip_gen: v7x
topology: tpu7x:2x2x1
jax: 0.10.0
libtpu: 0.0.40
codegen_flags: <defaults>
</compile_context>

<pallas_src>
import functools
import math

import jax
import jax.numpy as jnp
from jax import lax
from jax.experimental import pallas as pl
from jax.experimental.pallas import tpu as pltpu


# --------------------------------------------------------------------------- #
# Tiling / compiler-param helpers
# --------------------------------------------------------------------------- #
def _row_tile(n, pref=512):
    # Full array if small, else `pref` with a cdiv grid (OOB tail rows masked on store).
    return n if n <= pref else pref


def _attn_q_tile(t, pref=128):
    return t if t <= pref else pref


def _attn_k_tile(t):
    # Key tiles must exactly cover T (no out-of-bounds keys may leak into softmax).
    if t <= 512:
        return t
    for cand in (512, 384, 256, 128):
        if t % cand == 0:
            return cand
    # TODO(synk): pad T to a multiple of 128 in the wrapper for large ragged T.
    return t


def _compiler_params(sems, need_bytes):
    # Explicit scoped-VMEM limit: >= estimated need, capped below v7x physical (64 MiB).
    limit = int(min(56 << 20, max(24 << 20, int(need_bytes) + (8 << 20))))
    return pltpu.CompilerParams(dimension_semantics=sems, vmem_limit_bytes=limit)


# --------------------------------------------------------------------------- #
# Kernels
# --------------------------------------------------------------------------- #
def _qkv_kernel(x_ref, w_ref, b_ref, o_ref):
    # y = x @ W_qkv^T + b,  W pre-transposed/concatenated to (D, 3D) bf16; bf16 output.
    x = x_ref[...].astype(jnp.bfloat16)
    y = jnp.dot(x, w_ref[...], preferred_element_type=jnp.float32)
    o_ref[...] = (y + b_ref[...]).astype(jnp.bfloat16)


def _attn_kernel(seqlen_ref, punish_ref, q_ref, k_ref, v_ref, o_ref,
                 m_sc, l_sc, acc_sc, *, n_heads, d_e, tq, tk, inv_sqrt_t):
    # Grid = (B, NQ, NK); all E heads of one (batch, q-tile) per step, online softmax
    # over the key tiles.  q_ref (1,E,TQ,D_E) / k_ref (1,E,D_E,TK) / v_ref (1,E,TK,D_E).
    b = pl.program_id(0)
    qi = pl.program_id(1)
    ki = pl.program_id(2)
    valid = seqlen_ref[b]                                     # int32 scalar (SMEM)

    @pl.when(ki == 0)
    def _():
        m_sc[...] = jnp.full_like(m_sc, -jnp.inf)
        l_sc[...] = jnp.zeros_like(l_sc)
        acc_sc[...] = jnp.zeros_like(acc_sc)

    # Padding masks (1/sqrt(T) folded into the query mask), built from SMEM scalar.
    rows = qi * tq + lax.broadcasted_iota(jnp.int32, (tq, d_e), 0)
    qmask = jnp.where(rows < valid, inv_sqrt_t, 0.0).astype(jnp.bfloat16)
    cols = ki * tk + lax.broadcasted_iota(jnp.int32, (d_e, tk), 1)
    kmask = jnp.where(cols < valid, 1.0, 0.0).astype(jnp.bfloat16)

    q = q_ref[0] * qmask[None]                                # (E, TQ, D_E) bf16
    k = k_ref[0] * kmask[None]                                # (E, D_E, TK) bf16
    v = v_ref[0]                                              # (E, TK, D_E) bf16

    # scores = (Q/sqrt(T) masked) @ (K masked), contraction dim on RHS sublanes.
    s = jnp.einsum("hqd,hdk->hqk", q, k, preferred_element_type=jnp.float32)
    s = s * punish_ref[...][None]                             # precomputed gaussian punish
    # Faithful reproduction of masked_fill(att_score == 0, -2e20).
    s = jnp.where(s == 0.0, jnp.float32(-2e20), s)

    # Online softmax accumulation (f32).
    m_prev = m_sc[...]
    m_new = jnp.maximum(m_prev, jnp.max(s, axis=-1, keepdims=True))
    alpha = jnp.exp(m_prev - m_new)
    p = jnp.exp(s - m_new)
    l_sc[...] = alpha * l_sc[...] + jnp.sum(p, axis=-1, keepdims=True)
    acc_sc[...] = alpha * acc_sc[...] + jnp.einsum(
        "hqk,hkd->hqd", p.astype(jnp.bfloat16), v, preferred_element_type=jnp.float32)
    m_sc[...] = m_new

    @pl.when(ki == pl.num_programs(2) - 1)
    def _():
        out = acc_sc[...] / l_sc[...]                         # exact reciprocal (parity)
        # Standard head merge, written directly into the merged (1, TQ, D) output block.
        for h in range(n_heads):
            o_ref[0, :, h * d_e:(h + 1) * d_e] = out[h].astype(o_ref.dtype)


def _layernorm(x, eps=1e-6):
    mu = jnp.mean(x, axis=-1, keepdims=True)
    xc = x - mu
    var = jnp.mean(xc * xc, axis=-1, keepdims=True)
    return xc * lax.rsqrt(var + eps)


def _epilogue_kernel(ctx_ref, inp_ref, wo_ref, bo_ref, wl_ref, bl_ref, o_ref):
    # A = linear_o_(ctx); x1 = LN(A + input); out = LN(x1 + linear(x1))
    a = jnp.dot(ctx_ref[...].astype(jnp.bfloat16), wo_ref[...],
                preferred_element_type=jnp.float32) + bo_ref[...]
    x1 = _layernorm(a + inp_ref[...])
    x2 = jnp.dot(x1.astype(jnp.bfloat16), wl_ref[...],
                 preferred_element_type=jnp.float32) + bl_ref[...]
    o_ref[...] = _layernorm(x1 + x2)


# --------------------------------------------------------------------------- #
# Pallas wrappers
# --------------------------------------------------------------------------- #
def pallas_qkv_proj(x, w_qkv_t_bf16, b_qkv):
    n, din = x.shape
    dout = w_qkv_t_bf16.shape[1]
    tile = _row_tile(n)
    need = 2 * (tile * din * 4 + tile * dout * 2) + 2 * (din * dout * 2 + dout * 4)
    cost = pl.CostEstimate(
        flops=2 * n * din * dout, transcendentals=0,
        bytes_accessed=n * din * 4 + din * dout * 2 + dout * 4 + n * dout * 2)
    return pl.pallas_call(
        _qkv_kernel,
        grid=(pl.cdiv(n, tile),),
        out_shape=jax.ShapeDtypeStruct((n, dout), jnp.bfloat16),
        in_specs=[
            pl.BlockSpec((tile, din), lambda i: (i, 0)),
            pl.BlockSpec((din, dout), lambda i: (0, 0)),      # resident bf16 weight
            pl.BlockSpec((1, dout), lambda i: (0, 0)),
        ],
        out_specs=pl.BlockSpec((tile, dout), lambda i: (i, 0)),
        compiler_params=_compiler_params(("parallel",), need),
        cost_estimate=cost,
    )(x, w_qkv_t_bf16, b_qkv)


def pallas_attention(q4, k4t, v4, seqlen_i32, punish, *, B, E, T, D_E):
    D = E * D_E
    TQ = _attn_q_tile(T)
    TK = _attn_k_tile(T)
    NQ = pl.cdiv(T, TQ)
    NK = T // TK
    inv_sqrt_t = 1.0 / math.sqrt(float(T))
    kernel = functools.partial(_attn_kernel, n_heads=E, d_e=D_E, tq=TQ, tk=TK,
                               inv_sqrt_t=inv_sqrt_t)
    need = (2 * (TQ * TK * 4 + E * TQ * D_E * 2 + 2 * E * D_E * TK * 2 + TQ * D * 4)
            + E * TQ * (8 + 4 * D_E) + 3 * E * TQ * TK * 4)
    cost = pl.CostEstimate(
        flops=4 * B * E * T * T * D_E,
        transcendentals=B * E * T * T,
        bytes_accessed=3 * B * E * T * D_E * 2 + B * T * D * 4 + T * T * 4)
    return pl.pallas_call(
        kernel,
        grid_spec=pltpu.PrefetchScalarGridSpec(
            num_scalar_prefetch=1,                 # seq_len (int32) lands in SMEM
            grid=(B, NQ, NK),
            in_specs=[
                pl.BlockSpec((TQ, TK), lambda b, qi, ki, *_: (qi, ki)),              # punish
                pl.BlockSpec((1, E, TQ, D_E), lambda b, qi, ki, *_: (b, 0, qi, 0)),  # Q
                pl.BlockSpec((1, E, D_E, TK), lambda b, qi, ki, *_: (b, 0, 0, ki)),  # K^T
                pl.BlockSpec((1, E, TK, D_E), lambda b, qi, ki, *_: (b, 0, ki, 0)),  # V
            ],
            out_specs=pl.BlockSpec((1, TQ, D), lambda b, qi, ki, *_: (b, qi, 0)),
            scratch_shapes=[
                pltpu.VMEM((E, TQ, 1), jnp.float32),     # running max
                pltpu.VMEM((E, TQ, 1), jnp.float32),     # running denominator
                pltpu.VMEM((E, TQ, D_E), jnp.float32),   # running numerator
            ],
        ),
        out_shape=jax.ShapeDtypeStruct((B, T, D), jnp.float32),
        compiler_params=_compiler_params(("parallel", "parallel", "arbitrary"), need),
        cost_estimate=cost,
    )(seqlen_i32, punish, q4, k4t, v4)


def pallas_epilogue(ctx, inp, wo_t_bf16, bo, wl_t_bf16, bl):
    n, d = ctx.shape
    tile = _row_tile(n)
    need = 2 * (3 * tile * d * 4) + 2 * (2 * d * d * 2 + 2 * d * 4) + 4 * tile * d * 4
    cost = pl.CostEstimate(
        flops=4 * n * d * d, transcendentals=2 * n,
        bytes_accessed=3 * n * d * 4 + 2 * d * d * 2 + 2 * d * 4)
    return pl.pallas_call(
        _epilogue_kernel,
        grid=(pl.cdiv(n, tile),),
        out_shape=jax.ShapeDtypeStruct((n, d), jnp.float32),
        in_specs=[
            pl.BlockSpec((tile, d), lambda i: (i, 0)),        # attention context
            pl.BlockSpec((tile, d), lambda i: (i, 0)),        # residual input
            pl.BlockSpec((d, d), lambda i: (0, 0)),           # Wo^T (bf16, resident)
            pl.BlockSpec((1, d), lambda i: (0, 0)),
            pl.BlockSpec((d, d), lambda i: (0, 0)),           # Wlin^T (bf16, resident)
            pl.BlockSpec((1, d), lambda i: (0, 0)),
        ],
        out_specs=pl.BlockSpec((tile, d), lambda i: (i, 0)),
        compiler_params=_compiler_params(("parallel",), need),
        cost_estimate=cost,
    )(ctx, inp, wo_t_bf16, bo, wl_t_bf16, bl)


# --------------------------------------------------------------------------- #
# EncoderGSA forward
# --------------------------------------------------------------------------- #
def encoder_gsa_forward(params, x, seq_len, *, B, D, E):
    """x: (B, T, D) float32;  seq_len: python list of ints;  returns ((B,T,D), seq_len)."""
    T = max(seq_len)                       # this_batch_padlen
    assert x.shape == (B, T, D)
    D_E = D // E
    N = B * T

    xf = x.reshape(N, D)

    # Fused Q/K/V projection: weights concatenated, pre-transposed to (D, 3D), bf16 once.
    w_qkv_t = jnp.concatenate([params["wq"], params["wk"], params["wv"]], axis=0).T
    b_qkv = jnp.concatenate([params["bq"], params["bk"], params["bv"]], axis=1)
    qkv = pallas_qkv_proj(xf, w_qkv_t.astype(jnp.bfloat16), b_qkv)        # (N, 3D) bf16

    q_lin = qkv[:, :D].reshape(B, T, D)
    k_lin = qkv[:, D:2 * D].reshape(B, T, D)
    v_lin = qkv[:, 2 * D:].reshape(B, T, D)

    # Faithful reproduction of the module's head split:
    #   (B,T,D) -permute(0,2,1)-> (B,D,T) -reshape-> (B,E,T,D_E)
    # which interleaves time/feature indices (element-level scramble).
    # TODO(synk): this scrambled split cannot be expressed via BlockSpec index maps.
    def head_split(y):
        return jnp.transpose(y, (0, 2, 1)).reshape(B, E, T, D_E)

    q4 = head_split(q_lin)                                    # (B,E,T,D_E)  bf16
    k4t = jnp.transpose(head_split(k_lin), (0, 1, 3, 2))      # (B,E,D_E,T)  bf16 (pre-T)
    v4 = head_split(v_lin)                                    # (B,E,T,D_E)  bf16

    seqlen_i32 = jnp.asarray(seq_len, dtype=jnp.int32)        # (B,) -> SMEM prefetch

    # Gaussian punish matrix is grid-invariant: compute ONCE here (f32, like torch).
    idx = jnp.arange(T, dtype=jnp.float32)
    diff = idx[None, :] - idx[:, None]
    theta = params["theta"].astype(jnp.float32)
    punish = jnp.exp(-(diff * diff) / (theta * theta))        # (T, T)

    # Attention: flash-style, padding mask in-kernel, output already merged (B,T,D).
    ctx = pallas_attention(q4, k4t, v4, seqlen_i32, punish, B=B, E=E, T=T, D_E=D_E)

    # linear_o_ + residual + LN + encoder linear + residual + LN (fused, row-tiled).
    out = pallas_epilogue(
        ctx.reshape(N, D), xf,
        params["wo"].T.astype(jnp.bfloat16), params["bo"],
        params["wlin"].T.astype(jnp.bfloat16), params["blin"],
    ).reshape(B, T, D)
    return out, seq_len


# --------------------------------------------------------------------------- #
# Main
# --------------------------------------------------------------------------- #
if __name__ == "__main__":
    B, T, D, E = 2, 16, 32, 4          # batch, padded seq len, feature dim, heads
    seq_len = [16, 12]                 # max(seq_len) == T
    key = jax.random.PRNGKey(0)
    keys = jax.random.split(key, 12)

    def init_linear(kw, kb, dout, din):
        s = 1.0 / math.sqrt(din)
        w = jax.random.uniform(kw, (dout, din), jnp.float32, -s, s)
        b = jax.random.uniform(kb, (1, dout), jnp.float32, -s, s)
        return w, b

    wq, bq = init_linear(keys[0], keys[1], D, D)
    wk, bk = init_linear(keys[2], keys[3], D, D)
    wv, bv = init_linear(keys[4], keys[5], D, D)
    wo, bo = init_linear(keys[6], keys[7], D, D)
    wlin, blin = init_linear(keys[8], keys[9], D, D)

    params = {
        "wq": wq, "bq": bq,
        "wk": wk, "bk": bk,
        "wv": wv, "bv": bv,
        "wo": wo, "bo": bo,
        "wlin": wlin, "blin": blin,
        "theta": jnp.array([1.0], jnp.float32),   # init_gaussion_theta, is_punish=True
    }

    x = jax.random.normal(keys[10], (B, T, D), jnp.float32)

    out, sl = encoder_gsa_forward(params, x, seq_len, B=B, D=D, E=E)
    jax.block_until_ready(out)
    assert out.shape == (B, T, D) and out.dtype == jnp.float32
    print("KERNEL_OK")
</pallas_src>

<mosaic_0001>
module attributes {stable_mosaic.version = 11 : i64} {
  func.func @_qkv_kernel(%arg0: i32, %arg1: memref<32x32xf32, #tpu.memory_space<vmem>>, %arg2: memref<32x96xbf16, #tpu.memory_space<vmem>>, %arg3: memref<1x96xf32, #tpu.memory_space<vmem>>, %arg4: memref<32x96xbf16, #tpu.memory_space<vmem>>) attributes {dimension_semantics = [#tpu.dimension_semantics<parallel>], iteration_bounds = array<i64: 1>, scalar_prefetch = 0 : i64, scratch_operands = 0 : i64, tpu.core_type = #tpu.core_type<tc>, window_params = [{transform_indices = @transform_0, window_bounds = array<i64: 32, 32>}, {pipeline_mode = #tpu.pipeline_mode<synchronous>, transform_indices = @transform_1, window_bounds = array<i64: 32, 96>}, {pipeline_mode = #tpu.pipeline_mode<synchronous>, transform_indices = @transform_2, window_bounds = array<i64: 1, 96>}, {transform_indices = @transform_3, window_bounds = array<i64: 32, 96>}]} {
    %c0 = arith.constant 0 : index
    %c0_0 = arith.constant 0 : index
    %0 = vector.load %arg1[%c0, %c0_0] : memref<32x32xf32, #tpu.memory_space<vmem>>, vector<32x32xf32>
    %1 = arith.truncf %0 : vector<32x32xf32> to vector<32x32xbf16>
    %c0_1 = arith.constant 0 : index
    %c0_2 = arith.constant 0 : index
    %2 = vector.load %arg2[%c0_1, %c0_2] : memref<32x96xbf16, #tpu.memory_space<vmem>>, vector<32x96xbf16>
    %cst = arith.constant dense<0.000000e+00> : vector<32x96xf32>
    %3 = tpu.matmul %1, %2, %cst {dimension_numbers = #tpu.dot_dimension_numbers<[1], [0], [0], [1], [0, 0, 1, 1], [], []>} : vector<32x32xbf16>, vector<32x96xbf16>, vector<32x96xf32> -> vector<32x96xf32>
    %c0_3 = arith.constant 0 : index
    %c0_4 = arith.constant 0 : index
    %4 = vector.load %arg3[%c0_3, %c0_4] : memref<1x96xf32, #tpu.memory_space<vmem>>, vector<1x96xf32>
    %5 = vector.broadcast %4 : vector<1x96xf32> to vector<32x96xf32>
    %6 = arith.addf %3, %5 : vector<32x96xf32>
    %7 = arith.truncf %6 : vector<32x96xf32> to vector<32x96xbf16>
    %c0_5 = arith.constant 0 : index
    %c0_6 = arith.constant 0 : index
    %8 = vector.load %arg4[%c0_5, %c0_6] : memref<32x96xbf16, #tpu.memory_space<vmem>>, vector<32x96xbf16>
    tpu.vector_store %arg4[%c0_5, %c0_6], %7 {strides = array<i32>} : memref<32x96xbf16, #tpu.memory_space<vmem>>, vector<32x96xbf16>,
    return
  }
  func.func @transform_0(%arg0: i32) -> (i32, i32) {
    %c0_i32 = arith.constant 0 : i32
    %c0_i32_0 = arith.constant 0 : i32
    return %arg0, %c0_i32 : i32, i32
  }
  func.func @transform_1(%arg0: i32) -> (i32, i32) {
    %c0_i32 = arith.constant 0 : i32
    %c0_i32_0 = arith.constant 0 : i32
    %c0_i32_1 = arith.constant 0 : i32
    return %c0_i32, %c0_i32_0 : i32, i32
  }
  func.func @transform_2(%arg0: i32) -> (i32, i32) {
    %c0_i32 = arith.constant 0 : i32
    %c0_i32_0 = arith.constant 0 : i32
    %c0_i32_1 = arith.constant 0 : i32
    return %c0_i32, %c0_i32_0 : i32, i32
  }
  func.func @transform_3(%arg0: i32) -> (i32, i32) {
    %c0_i32 = arith.constant 0 : i32
    %c0_i32_0 = arith.constant 0 : i32
    return %arg0, %c0_i32 : i32, i32
  }
}

</mosaic_0001>

<llo_original>
// kernel: tpu_custom_call.1
$region0: #{tpu_custom_call.1}
  #allocation0 [shape = 'u32[]', space=smem, size = 0x4, offset = 0x4, fixed_abs, tag = 'smem constant byte address 0x4 - core index']
  #allocation1 [shape = 'u32[144,128]{1,0:T(1,128)}', space=vmem, size = 0x12000, scoped, tag = 'internal scratch']
  %s0 = inlined_call_operand.hbm [shape: f32[32,32], index: 0, kind: input, shape index: {}]
  %s1 = inlined_call_operand.hbm [shape: bf16[32,96], index: 1, kind: input, shape index: {}]
  %s2 = inlined_call_operand.vmem [shape: f32[1,96], index: 2, kind: input, shape index: {}]
  %s3 = inlined_call_operand.hbm [shape: bf16[32,96], index: 3, kind: output, shape index: {}]
  %s4 = sld [smem:[#allocation0]]
  $region30: #{tpu_custom_call.1} parent=0
    _
  %s6 = ssub.s32 1, %s4
  %s7 = scalar_select 0, %s6, %s4
  $region1: #{tpu_custom_call.1} parent=0
    #allocation2 [shape = 'u8[16384]{0}', space=vmem, size = 0x4000, scoped, tag = 'input window, operand 0, single buffered']
    #allocation3 [shape = 's32[1]{0}', space=sflag, size = 0x4, scoped, tag = 'scoped memory for tpu_custom_call.1']
    #allocation4 [shape = 's32[1]{0}', space=sflag, size = 0x4, scoped, tag = 'scoped memory for tpu_custom_call.1']
    #allocation5 [shape = 'u8[8192]{0}', space=vmem, size = 0x2000, scoped, tag = 'input window, operand 1, single buffered']
    #allocation6 [shape = 's32[1]{0}', space=sflag, size = 0x4, scoped, tag = 'scoped memory for tpu_custom_call.1']
    #allocation7 [shape = 'u8[8192]{0}', space=vmem, size = 0x2000, scoped, tag = 'output window, operand 0, single buffered']
    %8 = vsyncpa [#allocation3], 0
    %9 = vsyncpa [#allocation6], 0
    %10 = vsyncpa [#allocation4], 0
    // Predicated region
    $region2: #{tpu_custom_call.1} parent=1 // pred_check
      _
    $region3: #{tpu_custom_call.1} parent=1 // pred_check_branch
      %12 = sbr.rel (0) target = $region5
    $region4: #{tpu_custom_call.1} parent=1 // pred_region
      %s14 = ssub.s32 512, 512
      %15 = vsyncadd [#allocation3], %s14
      %s16 = sshll.u32 [#allocation2], 4
      %s17 = int_to_ptr.vmem [resolvable:$true] %s16
      %22 = dma.hbm_to_vmem [thread:$0]  %s0, 512, %s17, [#allocation3], 128, 128, 8
    $region5: #{tpu_custom_call.1} parent=1 // pred_fallthru
      _
    // Predicated region
    $region6: #{tpu_custom_call.1} parent=1 // pred_check
      _
    $region7: #{tpu_custom_call.1} parent=1 // pred_check_branch
      %24 = sbr.rel (0) target = $region9
    $region8: #{tpu_custom_call.1} parent=1 // pred_region
      %s26 = ssub.s32 256, 256
      %27 = vsyncadd [#allocation6], %s26
      %s28 = sshll.u32 [#allocation5], 4
      %s29 = int_to_ptr.vmem [resolvable:$true] %s28
      %34 = dma.hbm_to_vmem [thread:$0]  %s1, 256, %s29, [#allocation6], 64, 64, 4
    $region9: #{tpu_custom_call.1} parent=1 // pred_fallthru
      _
    // Predicated region
    $region10: #{tpu_custom_call.1} parent=1 // pred_check
      _
    $region11: #{tpu_custom_call.1} parent=1 // pred_check_branch
      %36 = sbr.rel (0) target = $region13
    $region12: #{tpu_custom_call.1} parent=1 // pred_region
      _
    $region13: #{tpu_custom_call.1} parent=1 // pred_fallthru
      _
    // Predicated region
    $region14: #{tpu_custom_call.1} parent=1 // pred_check
      _
    $region15: #{tpu_custom_call.1} parent=1 // pred_check_branch
      %38 = sbr.rel (0) target = $region17
    $region16: #{tpu_custom_call.1} parent=1 // pred_region
      %39 = dma.done [#allocation3], 512
    $region17: #{tpu_custom_call.1} parent=1 // pred_fallthru
      _
    // Predicated region
    $region18: #{tpu_custom_call.1} parent=1 // pred_check
      _
    $region19: #{tpu_custom_call.1} parent=1 // pred_check_branch
      %41 = sbr.rel (0) target = $region21
    $region20: #{tpu_custom_call.1} parent=1 // pred_region
      %42 = dma.done [#allocation6], 256
    $region21: #{tpu_custom_call.1} parent=1 // pred_fallthru
      _
    %v44 = vld [vmem:[#allocation2] sm:$0xff]
    %v45 = vld [vmem:[#allocation2 + $0x8] sm:$0xff]
    %v46 = vld [vmem:[#allocation2 + $0x10] sm:$0xff]
    %v47 = vld [vmem:[#allocation2 + $0x18] sm:$0xff]
    %v48 = vpack.c.bf16 %v45, %v44
    %v49 = vpack.c.bf16 %v47, %v46
    %v50 = vld [vmem:[#allocation5] sm:$0xf]
    %v51 = vld [vmem:[#allocation5 + $0x4] sm:$0xf]
    %v52 = vld [vmem:[#allocation5 + $0x8] sm:$0xf]
    %v53 = vld [vmem:[#allocation5 + $0xc] sm:$0xf]
    %v54 = vld [vmem:[%s2] sm:$0x1]
    %v56 = vlaneseq
    %v57 = vshrl.u32 %v56, 7
    %v58 = vsub.s32 0, %v57
    %v59 = vrot.slane %v54, %v58
    %v65 = vunpack.c.l.b16 %v50
    %v66 = vunpack.c.l.b16 %v51
    %v67 = vunpack.c.l.b16 %v52
    %v68 = vunpack.c.l.b16 %v53
    %v69 = vpack.c.b16 %v66, %v65
    %v70 = vpack.c.b16 %v68, %v67
    %vm73 = vcmask 261120
    %v75 = vsel %vm73, %v48, 0
    %v78 = vsel %vm73, %v49, 0
    %80 = vmatprep.subr.bf16.mxu0 0
    %81 = vmatpush1.bf16.msra.mxu0 %v69
    %82 = vmatprep.subr.bf16.mxu0 0
    %83 = vmatpush1.bf16.msra.mxu0 %v70
    %84 = vmatprep.subr.bf16.mxu0 0
    %85 = vmatpush1.bf16.msra.mxu0 0
    %86 = vmatprep.subr.bf16.mxu0 0
    %87 = vmatpush1.bf16.msra.mxu0 0
    %88 = vmatprep.subr.bf16.mxu0 0
    %89 = vmatpush1.bf16.msra.mxu0 0
    %90 = vmatprep.subr.bf16.mxu0 0
    %91 = vmatpush1.bf16.msra.mxu0 0
    %92 = vmatprep.subr.bf16.mxu0 0
    %93 = vmatpush1.bf16.msra.mxu0 0
    %94 = vmatprep.subr.bf16.mxu0 0
    %95 = vmatpush1.bf16.msra.mxu0 0
    %96 = vmatprep.subr.bf16.mxu0 0
    %97 = vmatpush1.bf16.msra.mxu0 0
    %98 = vmatprep.subr.bf16.mxu0 0
    %99 = vmatpush1.bf16.msra.mxu0 0
    %100 = vmatprep.subr.bf16.mxu0 0
    %101 = vmatpush1.bf16.msra.mxu0 0
    %102 = vmatprep.subr.bf16.mxu0 0
    %103 = vmatpush1.bf16.msra.mxu0 0
    %104 = vmatprep.subr.bf16.mxu0 0
    %105 = vmatpush1.bf16.msra.mxu0 0
    %106 = vmatprep.subr.bf16.mxu0 0
    %107 = vmatpush1.bf16.msra.mxu0 0
    %108 = vmatprep.subr.bf16.mxu0 0
    %109 = vmatpush1.bf16.msra.mxu0 0
    %110 = vmatprep.subr.bf16.mxu0 0
    %111 = vmatpush1.bf16.msra.mxu0 0
    %112 = vmatprep.mubr.bf16.mxu0 0
    %113 = vmatmul.mubr.bf16.gmra.mrb[0].mxu0 %v75
    %v114 = vpop.f32.mrb[0].mxu0
    %v115 = vadd.f32 %v59, %v114
    %v116 = vpop.f32.mrb[0].mxu0
    %v117 = vpop.f32.mrb[0].mxu0
    %v118 = vadd.f32 %v59, %v117
    %v119 = vpop.f32.mrb[0].mxu0
    %120 = vmatprep.mubr.bf16.mxu0 0
    %121 = vmatmul.mubr.bf16.gmra.mrb[0].mxu0 %v78
    %v122 = vpop.f32.mrb[0].mxu0
    %v123 = vadd.f32 %v59, %v122
    %v124 = vpop.f32.mrb[0].mxu0
    %v125 = vpop.f32.mrb[0].mxu0
    %v126 = vadd.f32 %v59, %v125
    %v127 = vpop.f32.mrb[0].mxu0
    %128 = vdwg.mxu0
    %v129 = vpack.c.bf16 %v118, %v115
    %v130 = vpack.c.bf16 %v126, %v123
    %v133 = vunpack.c.l.b16 %v129
    %v134 = vunpack.c.h.b16 %v129
    %v135 = vunpack.c.l.b16 %v130
    %v136 = vunpack.c.h.b16 %v130
    %v137 = vpack.c.b16 %v133, %v133
    %v138 = vpack.c.b16 %v134, %v134
    %v139 = vpack.c.b16 %v135, %v135
    %v140 = vpack.c.b16 %v136, %v136
    %vm145 = vcmask 781312
    %146 = vst.msk [vmem:[#allocation7] sm:$0xf] %vm145, %v137
    %147 = vst.msk [vmem:[#allocation7 + $0x4] sm:$0xf] %vm145, %v138
    %148 = vst.msk [vmem:[#allocation7 + $0x8] sm:$0xf] %vm145, %v139
    %149 = vst.msk [vmem:[#allocation7 + $0xc] sm:$0xf] %vm145, %v140
    // Predicated region
    $region22: #{tpu_custom_call.1} parent=1 // pred_check
      _
    $region23: #{tpu_custom_call.1} parent=1 // pred_check_branch
      %151 = sbr.rel (0) target = $region25
    $region24: #{tpu_custom_call.1} parent=1 // pred_region
      %s153 = ssub.s32 256, 256
      %154 = vsyncadd [#allocation4], %s153
      %s155 = sshll.u32 [#allocation7], 4
      %s156 = int_to_ptr.vmem [resolvable:$true] %s155
      %161 = dma.vmem_to_hbm [thread:$0]  %s156, 256, %s3, [#allocation4], 64, 64, 4
    $region25: #{tpu_custom_call.1} parent=1 // pred_fallthru
      _
    // Predicated region
    $region26: #{tpu_custom_call.1} parent=1 // pred_check
      _
    $region27: #{tpu_custom_call.1} parent=1 // pred_check_branch
      %163 = sbr.rel (0) target = $region29
    $region28: #{tpu_custom_call.1} parent=1 // pred_region
      %164 = dma.done [#allocation4], 256
    $region29: #{tpu_custom_call.1} parent=1 // pred_fallthru
      _
    %165 = vsyncpa [#allocation3], 1
    %166 = vsyncpa [#allocation6], 1
    %167 = vsyncpa [#allocation4], 1

</llo_original>
